<compile_context>
chip_gen: v6e
topology: v6e:2x2x1
jax: 0.10.0
libtpu: 0.0.40
codegen_flags: <defaults>
</compile_context>

<pallas_src>
import functools
import math

import numpy as np
import jax
import jax.numpy as jnp
from jax import lax
from jax.experimental import pallas as pl
from jax.experimental.pallas import tpu as pltpu


def _round_up(x: int, m: int) -> int:
    return ((x + m - 1) // m) * m


def _dft_matrices(seq_len: int, f_pad: int):
    """Real/imag rfft and irfft ('ortho') matrices, F zero-padded, bf16.

    Returns:
      c   : (2, f_pad, seq_len) bf16, c[0]=Cr, c[1]=Ci    (rfft:  Xr=Cr@x, Xi=Ci@x)
      iri : (2, seq_len, f_pad) bf16, iri[0]=Ir, iri[1]=Ii (irfft: x=Ir@Xr+Ii@Xi)
    """
    n_freq = seq_len // 2 + 1
    n = np.arange(seq_len)[None, :]
    k = np.arange(n_freq)[:, None]
    ang = 2.0 * np.pi * k * n / seq_len
    scale = 1.0 / math.sqrt(seq_len)

    cr = np.cos(ang) * scale
    ci = -np.sin(ang) * scale

    ck = np.full((n_freq,), 2.0)
    ck[0] = 1.0
    if seq_len % 2 == 0:
        ck[-1] = 1.0
    ir = np.cos(ang).T * ck[None, :] * scale
    ii = -np.sin(ang).T * ck[None, :] * scale

    c = np.zeros((2, f_pad, seq_len), np.float32)
    c[0, :n_freq] = cr
    c[1, :n_freq] = ci
    iri = np.zeros((2, seq_len, f_pad), np.float32)
    iri[0, :, :n_freq] = ir
    iri[1, :, :n_freq] = ii
    # bf16 MXU operands; accumulation stays f32 via preferred_element_type.
    return jnp.asarray(c, jnp.bfloat16), jnp.asarray(iri, jnp.bfloat16)


def _prenorm_filter_kernel(x_ref, c_ref, iri_ref, w_ref, ln_ref, o_ref, *,
                           tile_s, inv_hidden, eps):
    x = x_ref[...]                                        # (S, H) f32

    # --- pre-norm: LayerNorm(x) over the true hidden lanes ------------------
    mu = jnp.sum(x, axis=-1, keepdims=True) * inv_hidden
    d = x - mu
    var = jnp.sum(d * d, axis=-1, keepdims=True) * inv_hidden
    normed = d * lax.rsqrt(var + eps)                     # rsqrt -> EUP slot
    normed = normed * ln_ref[0] + ln_ref[1]               # gamma / beta (1, H)
    nb = normed.astype(jnp.bfloat16)

    # --- fn: rfft as two bf16 MXU matmuls, f32 accumulation ------------------
    xr = jnp.dot(c_ref[0], nb, preferred_element_type=jnp.float32)  # (Fp, H)
    xi = jnp.dot(c_ref[1], nb, preferred_element_type=jnp.float32)

    # --- learned complex filter (bf16 weights upcast in the VPU) -------------
    wr = w_ref[0].astype(jnp.float32)
    wi = w_ref[1].astype(jnp.float32)
    yr = (xr * wr - xi * wi).astype(jnp.bfloat16)
    yi = (xr * wi + xi * wr).astype(jnp.bfloat16)

    # --- irfft for this output S-tile: two dots, no spectrum scratch ---------
    y = (jnp.dot(iri_ref[0], yr, preferred_element_type=jnp.float32)
         + jnp.dot(iri_ref[1], yi, preferred_element_type=jnp.float32))  # (tile_s, H)

    # --- residual -------------------------------------------------------------
    if tile_s == x.shape[0]:
        x_tile = x
    else:
        row0 = pl.multiple_of(pl.program_id(1) * tile_s, 8)
        x_tile = x_ref[pl.ds(row0, tile_s), :]
    o_ref[...] = (y + x_tile).astype(o_ref.dtype)


def _vmem_limit_bytes(resident_bytes: int) -> int:
    cap = 128 * (1 << 20)
    try:
        info = pltpu.get_tpu_info()
        cap = int(getattr(info, "vmem_capacity_bytes", cap) or cap)
    except Exception:
        pass
    ceiling = int(0.87 * cap)            # leave headroom for Mosaic scratch
    return int(max(32 << 20, min(ceiling, 2 * resident_bytes)))


def _num_tensorcores() -> int:
    try:
        info = pltpu.get_tpu_info()
        for name in ("num_tensorcores", "tensorcore_count", "num_cores",
                     "core_count", "cores_per_chip"):
            v = getattr(info, name, None)
            if isinstance(v, int) and v >= 1:
                return v
    except Exception:
        pass
    return 1


@jax.jit
def pre_norm_residual(x, complex_weight, ln_weight, ln_bias):
    """PreNormResidual forward: fn(LayerNorm(x)) + x.

    fn = learned frequency-domain complex filter.
    x: (B, S, H) f32; complex_weight: (1, S//2+1, H, 2); ln_weight/ln_bias: (H,)
    """
    B, S, H = x.shape
    F = S // 2 + 1
    F_pad = _round_up(F, 128)            # lane-dense irfft operands / K dims
    eps = 1e-5                           # nn.LayerNorm default
    f32 = jnp.float32

    c, iri = _dft_matrices(S, F_pad)

    w = jnp.zeros((2, F_pad, H), jnp.bfloat16)
    w = w.at[0, :F].set(complex_weight[0, :, :, 0].astype(jnp.bfloat16))
    w = w.at[1, :F].set(complex_weight[0, :, :, 1].astype(jnp.bfloat16))
    ln = jnp.stack([ln_weight.astype(f32), ln_bias.astype(f32)]).reshape(2, 1, H)

    # Optional second 'parallel' axis over S output tiles: keeps both
    # TensorCores busy when B is odd (v7x).  rfft is recomputed per tile.
    ns = 2 if (B % 2 == 1 and S % 16 == 0 and _num_tensorcores() >= 2) else 1
    tile_s = S // ns

    x = x.astype(f32)

    resident = (c.size * 2 + 2 * iri.size * 2          # DFT matrices (bf16)
                + w.size * 2 + ln.size * 4             # filter + LN params
                + 2 * S * H * 4 + 2 * tile_s * H * 4   # x / out double-buffered
                + S * H * 6                            # normed f32 + bf16 cast
                + 2 * F_pad * H * 4 + 2 * F_pad * H * 2  # xr/xi + yr/yi
                + tile_s * H * 4)                      # y

    def const_spec(shape):
        # Grid-invariant operand: constant index map + single buffer.
        return pl.BlockSpec(shape, lambda b, s: (0,) * len(shape),
                            pipeline_mode=pl.Buffered(1))

    kernel = functools.partial(_prenorm_filter_kernel, tile_s=tile_s,
                               inv_hidden=1.0 / H, eps=eps)

    out = pl.pallas_call(
        kernel,
        out_shape=jax.ShapeDtypeStruct((B, S, H), f32),
        grid_spec=pltpu.PrefetchScalarGridSpec(
            num_scalar_prefetch=0,
            grid=(B, ns),
            in_specs=[
                pl.BlockSpec((pl.Squeezed(), S, H), lambda b, s: (b, 0, 0)),
                const_spec((2, F_pad, S)),                       # [Cr, Ci]
                pl.BlockSpec((2, tile_s, F_pad), lambda b, s: (0, s, 0)),  # [Ir, Ii]
                const_spec((2, F_pad, H)),                       # filter (bf16)
                const_spec((2, 1, H)),                           # gamma / beta
            ],
            out_specs=pl.BlockSpec((pl.Squeezed(), tile_s, H),
                                   lambda b, s: (b, s, 0)),
        ),
        compiler_params=pltpu.CompilerParams(
            dimension_semantics=("parallel", "parallel"),
            vmem_limit_bytes=_vmem_limit_bytes(resident)),
    )(x, c, iri, w, ln)

    return out


def _reference(x, complex_weight, ln_weight, ln_bias, eps=1e-5):
    """Pure-JAX reference for PreNormResidual with the FFT-filter fn (eval mode)."""
    B, S, H = x.shape
    u = jnp.mean(x, axis=-1, keepdims=True)
    v = jnp.mean((x - u) ** 2, axis=-1, keepdims=True)
    n = (x - u) / jnp.sqrt(v + eps)
    n = ln_weight * n + ln_bias
    xf = jnp.fft.rfft(n, axis=1, norm="ortho")
    w = complex_weight[..., 0] + 1j * complex_weight[..., 1]    # (1, F, H)
    y = jnp.fft.irfft(xf * w, n=S, axis=1, norm="ortho").astype(jnp.float32)
    return y + x


if __name__ == "__main__":
    B, S, H = 2, 8, 32          # batch, max_seq_length, hidden_size (dim)
    F = S // 2 + 1

    key = jax.random.PRNGKey(0)
    kx, kw, kg, kb = jax.random.split(key, 4)
    x = jax.random.normal(kx, (B, S, H), dtype=jnp.float32)
    complex_weight = 0.02 * jax.random.normal(kw, (1, F, H, 2), dtype=jnp.float32)
    ln_weight = 1.0 + 0.1 * jax.random.normal(kg, (H,), dtype=jnp.float32)
    ln_bias = 0.1 * jax.random.normal(kb, (H,), dtype=jnp.float32)

    out = jax.block_until_ready(
        pre_norm_residual(x, complex_weight, ln_weight, ln_bias))

    ref = _reference(x, complex_weight, ln_weight, ln_bias)
    # bf16 MXU operands (f32 accumulation) -> bf16-level tolerance vs f32 FFT ref.
    np.testing.assert_allclose(np.asarray(out), np.asarray(ref),
                               rtol=5e-2, atol=5e-3)

    print("KERNEL_OK")
</pallas_src>

<mosaic_0001>
module attributes {stable_mosaic.version = 11 : i64} {
  func.func @_prenorm_filter_kernel(%arg0: i32, %arg1: i32, %arg2: memref<1x8x32xf32, #tpu.memory_space<vmem>>, %arg3: memref<2x128x8xbf16, #tpu.memory_space<vmem>>, %arg4: memref<2x8x128xbf16, #tpu.memory_space<vmem>>, %arg5: memref<2x128x32xbf16, #tpu.memory_space<vmem>>, %arg6: memref<2x1x32xf32, #tpu.memory_space<vmem>>, %arg7: memref<1x8x32xf32, #tpu.memory_space<vmem>>) attributes {dimension_semantics = [#tpu.dimension_semantics<parallel>, #tpu.dimension_semantics<parallel>], iteration_bounds = array<i64: 2, 1>, scalar_prefetch = 0 : i64, scratch_operands = 0 : i64, tpu.core_type = #tpu.core_type<tc>, window_params = [{transform_indices = @transform_0, window_bounds = array<i64: 1, 8, 32>}, {pipeline_mode = #tpu.pipeline_mode<synchronous>, transform_indices = @transform_1, window_bounds = array<i64: 2, 128, 8>}, {transform_indices = @transform_2, window_bounds = array<i64: 2, 8, 128>}, {pipeline_mode = #tpu.pipeline_mode<synchronous>, transform_indices = @transform_3, window_bounds = array<i64: 2, 128, 32>}, {pipeline_mode = #tpu.pipeline_mode<synchronous>, transform_indices = @transform_4, window_bounds = array<i64: 2, 1, 32>}, {transform_indices = @transform_5, window_bounds = array<i64: 1, 8, 32>}]} {
    %c0 = arith.constant 0 : index
    %c0_0 = arith.constant 0 : index
    %c0_1 = arith.constant 0 : index
    %0 = vector.load %arg2[%c0, %c0_0, %c0_1] : memref<1x8x32xf32, #tpu.memory_space<vmem>>, vector<1x8x32xf32>
    %1 = vector.shape_cast %0 : vector<1x8x32xf32> to vector<8x32xf32>
    %cst = arith.constant dense<0.000000e+00> : vector<8xf32>
    %2 = vector.multi_reduction <add>, %1, %cst [1] : vector<8x32xf32> to vector<8xf32>
    %3 = vector.shape_cast %2 : vector<8xf32> to vector<8x1xf32>
    %cst_2 = arith.constant 3.125000e-02 : f32
    %4 = vector.broadcast %cst_2 : f32 to vector<8x1xf32>
    %5 = arith.mulf %3, %4 : vector<8x1xf32>
    %6 = vector.broadcast %5 : vector<8x1xf32> to vector<8x32xf32>
    %7 = arith.subf %1, %6 : vector<8x32xf32>
    %8 = arith.mulf %7, %7 : vector<8x32xf32>
    %cst_3 = arith.constant dense<0.000000e+00> : vector<8xf32>
    %9 = vector.multi_reduction <add>, %8, %cst_3 [1] : vector<8x32xf32> to vector<8xf32>
    %10 = vector.shape_cast %9 : vector<8xf32> to vector<8x1xf32>
    %cst_4 = arith.constant 3.125000e-02 : f32
    %11 = vector.broadcast %cst_4 : f32 to vector<8x1xf32>
    %12 = arith.mulf %10, %11 : vector<8x1xf32>
    %cst_5 = arith.constant 9.99999974E-6 : f32
    %13 = vector.broadcast %cst_5 : f32 to vector<8x1xf32>
    %14 = arith.addf %12, %13 : vector<8x1xf32>
    %15 = math.rsqrt %14 : vector<8x1xf32>
    %16 = vector.broadcast %15 : vector<8x1xf32> to vector<8x32xf32>
    %17 = arith.mulf %7, %16 : vector<8x32xf32>
    %c0_6 = arith.constant 0 : index
    %c0_7 = arith.constant 0 : index
    %c0_8 = arith.constant 0 : index
    %18 = vector.load %arg6[%c0_6, %c0_7, %c0_8] : memref<2x1x32xf32, #tpu.memory_space<vmem>>, vector<1x1x32xf32>
    %19 = vector.shape_cast %18 : vector<1x1x32xf32> to vector<1x32xf32>
    %20 = vector.broadcast %19 : vector<1x32xf32> to vector<8x32xf32>
    %21 = arith.mulf %17, %20 : vector<8x32xf32>
    %c1 = arith.constant 1 : index
    %c0_9 = arith.constant 0 : index
    %c0_10 = arith.constant 0 : index
    %22 = vector.load %arg6[%c1, %c0_9, %c0_10] : memref<2x1x32xf32, #tpu.memory_space<vmem>>, vector<1x1x32xf32>
    %23 = vector.shape_cast %22 : vector<1x1x32xf32> to vector<1x32xf32>
    %24 = vector.broadcast %23 : vector<1x32xf32> to vector<8x32xf32>
    %25 = arith.addf %21, %24 : vector<8x32xf32>
    %26 = arith.truncf %25 : vector<8x32xf32> to vector<8x32xbf16>
    %c0_11 = arith.constant 0 : index
    %c0_12 = arith.constant 0 : index
    %c0_13 = arith.constant 0 : index
    %27 = vector.load %arg3[%c0_11, %c0_12, %c0_13] : memref<2x128x8xbf16, #tpu.memory_space<vmem>>, vector<1x128x8xbf16>
    %28 = vector.shape_cast %27 : vector<1x128x8xbf16> to vector<128x8xbf16>
    %cst_14 = arith.constant dense<0.000000e+00> : vector<128x32xf32>
    %29 = tpu.matmul %28, %26, %cst_14 {dimension_numbers = #tpu.dot_dimension_numbers<[1], [0], [0], [1], [0, 0, 1, 1], [], []>} : vector<128x8xbf16>, vector<8x32xbf16>, vector<128x32xf32> -> vector<128x32xf32>
    %c1_15 = arith.constant 1 : index
    %c0_16 = arith.constant 0 : index
    %c0_17 = arith.constant 0 : index
    %30 = vector.load %arg3[%c1_15, %c0_16, %c0_17] : memref<2x128x8xbf16, #tpu.memory_space<vmem>>, vector<1x128x8xbf16>
    %31 = vector.shape_cast %30 : vector<1x128x8xbf16> to vector<128x8xbf16>
    %cst_18 = arith.constant dense<0.000000e+00> : vector<128x32xf32>
    %32 = tpu.matmul %31, %26, %cst_18 {dimension_numbers = #tpu.dot_dimension_numbers<[1], [0], [0], [1], [0, 0, 1, 1], [], []>} : vector<128x8xbf16>, vector<8x32xbf16>, vector<128x32xf32> -> vector<128x32xf32>
    %c0_19 = arith.constant 0 : index
    %c0_20 = arith.constant 0 : index
    %c0_21 = arith.constant 0 : index
    %33 = vector.load %arg5[%c0_19, %c0_20, %c0_21] : memref<2x128x32xbf16, #tpu.memory_space<vmem>>, vector<1x128x32xbf16>
    %34 = vector.shape_cast %33 : vector<1x128x32xbf16> to vector<128x32xbf16>
    %35 = arith.extf %34 : vector<128x32xbf16> to vector<128x32xf32>
    %c1_22 = arith.constant 1 : index
    %c0_23 = arith.constant 0 : index
    %c0_24 = arith.constant 0 : index
    %36 = vector.load %arg5[%c1_22, %c0_23, %c0_24] : memref<2x128x32xbf16, #tpu.memory_space<vmem>>, vector<1x128x32xbf16>
    %37 = vector.shape_cast %36 : vector<1x128x32xbf16> to vector<128x32xbf16>
    %38 = arith.extf %37 : vector<128x32xbf16> to vector<128x32xf32>
    %39 = arith.mulf %29, %35 : vector<128x32xf32>
    %40 = arith.mulf %32, %38 : vector<128x32xf32>
    %41 = arith.subf %39, %40 : vector<128x32xf32>
    %42 = arith.truncf %41 : vector<128x32xf32> to vector<128x32xbf16>
    %43 = arith.mulf %29, %38 : vector<128x32xf32>
    %44 = arith.mulf %32, %35 : vector<128x32xf32>
    %45 = arith.addf %43, %44 : vector<128x32xf32>
    %46 = arith.truncf %45 : vector<128x32xf32> to vector<128x32xbf16>
    %c0_25 = arith.constant 0 : index
    %c0_26 = arith.constant 0 : index
    %c0_27 = arith.constant 0 : index
    %47 = vector.load %arg4[%c0_25, %c0_26, %c0_27] : memref<2x8x128xbf16, #tpu.memory_space<vmem>>, vector<1x8x128xbf16>
    %48 = vector.shape_cast %47 : vector<1x8x128xbf16> to vector<8x128xbf16>
    %cst_28 = arith.constant dense<0.000000e+00> : vector<8x32xf32>
    %49 = tpu.matmul %48, %42, %cst_28 {dimension_numbers = #tpu.dot_dimension_numbers<[1], [0], [0], [1], [0, 0, 1, 1], [], []>} : vector<8x128xbf16>, vector<128x32xbf16>, vector<8x32xf32> -> vector<8x32xf32>
    %c1_29 = arith.constant 1 : index
    %c0_30 = arith.constant 0 : index
    %c0_31 = arith.constant 0 : index
    %50 = vector.load %arg4[%c1_29, %c0_30, %c0_31] : memref<2x8x128xbf16, #tpu.memory_space<vmem>>, vector<1x8x128xbf16>
    %51 = vector.shape_cast %50 : vector<1x8x128xbf16> to vector<8x128xbf16>
    %cst_32 = arith.constant dense<0.000000e+00> : vector<8x32xf32>
    %52 = tpu.matmul %51, %46, %cst_32 {dimension_numbers = #tpu.dot_dimension_numbers<[1], [0], [0], [1], [0, 0, 1, 1], [], []>} : vector<8x128xbf16>, vector<128x32xbf16>, vector<8x32xf32> -> vector<8x32xf32>
    %53 = arith.addf %49, %52 : vector<8x32xf32>
    %54 = arith.addf %53, %1 : vector<8x32xf32>
    %c0_33 = arith.constant 0 : index
    %c0_34 = arith.constant 0 : index
    %c0_35 = arith.constant 0 : index
    %55 = vector.load %arg7[%c0_33, %c0_34, %c0_35] : memref<1x8x32xf32, #tpu.memory_space<vmem>>, vector<1x8x32xf32>
    %56 = vector.shape_cast %55 : vector<1x8x32xf32> to vector<8x32xf32>
    %57 = vector.shape_cast %54 : vector<8x32xf32> to vector<1x8x32xf32>
    tpu.vector_store %arg7[%c0_33, %c0_34, %c0_35], %57 {strides = array<i32>} : memref<1x8x32xf32, #tpu.memory_space<vmem>>, vector<1x8x32xf32>,
    return
  }
  func.func @transform_0(%arg0: i32, %arg1: i32) -> (i32, i32, i32) {
    %c0_i32 = arith.constant 0 : i32
    %c0_i32_0 = arith.constant 0 : i32
    %c0_i32_1 = arith.constant 0 : i32
    return %arg0, %c0_i32, %c0_i32_0 : i32, i32, i32
  }
  func.func @transform_1(%arg0: i32, %arg1: i32) -> (i32, i32, i32) {
    %c0_i32 = arith.constant 0 : i32
    %c0_i32_0 = arith.constant 0 : i32
    %c0_i32_1 = arith.constant 0 : i32
    %c0_i32_2 = arith.constant 0 : i32
    return %c0_i32, %c0_i32_0, %c0_i32_1 : i32, i32, i32
  }
  func.func @transform_2(%arg0: i32, %arg1: i32) -> (i32, i32, i32) {
    %c0_i32 = arith.constant 0 : i32
    %c0_i32_0 = arith.constant 0 : i32
    %c0_i32_1 = arith.constant 0 : i32
    return %c0_i32, %arg1, %c0_i32_0 : i32, i32, i32
  }
  func.func @transform_3(%arg0: i32, %arg1: i32) -> (i32, i32, i32) {
    %c0_i32 = arith.constant 0 : i32
    %c0_i32_0 = arith.constant 0 : i32
    %c0_i32_1 = arith.constant 0 : i32
    %c0_i32_2 = arith.constant 0 : i32
    return %c0_i32, %c0_i32_0, %c0_i32_1 : i32, i32, i32
  }
  func.func @transform_4(%arg0: i32, %arg1: i32) -> (i32, i32, i32) {
    %c0_i32 = arith.constant 0 : i32
    %c0_i32_0 = arith.constant 0 : i32
    %c0_i32_1 = arith.constant 0 : i32
    %c0_i32_2 = arith.constant 0 : i32
    return %c0_i32, %c0_i32_0, %c0_i32_1 : i32, i32, i32
  }
  func.func @transform_5(%arg0: i32, %arg1: i32) -> (i32, i32, i32) {
    %c0_i32 = arith.constant 0 : i32
    %c0_i32_0 = arith.constant 0 : i32
    return %arg0, %arg1, %c0_i32 : i32, i32, i32
  }
}

</mosaic_0001>

<llo_original>
// kernel: pre_norm_residual.1
$region0: #{pre_norm_residual.1}
  #allocation0 [shape = 'u32[]', space=smem, size = 0x4, offset = 0x4, fixed_abs, tag = 'smem constant byte address 0x4 - core index']
  #allocation1 [shape = 'u32[144,128]{1,0:T(1,128)}', space=vmem, size = 0x12000, scoped, tag = 'internal scratch']
  %s0 = inlined_call_operand.vmem [shape: f32[2,8,32], index: 0, kind: input, shape index: {}]
  %s1 = inlined_call_operand.vmem [shape: bf16[2,128,8], index: 1, kind: input, shape index: {}]
  %s2 = inlined_call_operand.vmem [shape: bf16[2,8,128], index: 2, kind: input, shape index: {}]
  %s3 = inlined_call_operand.vmem [shape: bf16[2,128,32], index: 3, kind: input, shape index: {}]
  %s4 = inlined_call_operand.vmem [shape: f32[2,1,32], index: 4, kind: input, shape index: {}]
  %s5 = inlined_call_operand.hbm [shape: f32[2,8,32], index: 5, kind: output, shape index: {}]
  %s6 = sld [smem:[#allocation0]]
  $region53: #{pre_norm_residual.1} parent=0
    _
  %s8 = ssub.s32 1, %s6
  %s9 = scalar_select 0, %s8, %s6
  $region1: #{pre_norm_residual.1} parent=0
    #allocation2 [shape = 'u8[8192]{0}', space=vmem, size = 0x2000, scoped, tag = 'output window, operand 0']
    #allocation3 [shape = 's32[2]{0}', space=sflag, size = 0x8, scoped, tag = 'scoped memory for pre_norm_residual.1']
    %10 = vsyncpa [#allocation3], 0
    %s11 = scalar_lea.sflag [#allocation3], 1
    %12 = vsyncpa %s11, 0
    loop: start=0, step=1, limit=4
    $region2: #{pre_norm_residual.1} parent=1 // loop_pre_header
      _
    $region3: #{pre_norm_residual.1} parent=1 // loop_header
      %s14 = sphi 0, %s18
      %p15 = scmp.ge.s32.totalorder %s14, 4
      %s21 = sphi 0, %s33
      %s22 = sphi 0, %s29
      %s23 = sphi 0, %s21
      %s24 = sphi 0, %s22
      %s25 = sphi 0, %s23
      %s26 = sphi 0, %s24
      %s36 = sphi 0, %s38
      %s39 = sphi 0, %s36
      %s40 = sphi 0, %s39
      %s56 = sphi 0, %s40
      %s60 = sphi 0, %s60
      %s62 = sphi 0, %s60
      %s63 = sphi 0, %s62
      %s77 = sphi 0, %s63
      %s83 = sphi 0, %s85
      %s86 = sphi 0, %s83
      %s87 = sphi 0, %s86
      %s103 = sphi 0, %s87
      %s107 = sphi 0, %s107
      %s109 = sphi 0, %s107
      %s110 = sphi 0, %s109
      %s124 = sphi 0, %s110
      %s128 = sphi 0, %s128
      %s130 = sphi 0, %s128
      %s131 = sphi 0, %s130
      %s145 = sphi 0, %s131
      %s153 = sphi 0, %s155
      %s156 = sphi 0, %s153
      %s157 = sphi 0, %s156
      %s173 = sphi 0, %s157
    $region4: #{pre_norm_residual.1} parent=1 // loop_header_branch
      %17 = sbr.rel (%p15) target = $region8
    $region5: #{pre_norm_residual.1} parent=1 // loop_body
      %s19 = ssub.s32 %s14, 1
      %s20 = ssub.s32 %s14, 2
      %s27 = sadd.s32 1, %s22
      %p28 = scmp.ge.s32.totalorder %s27, 1
      %s29 = scalar_select %p28, 0, %s27
      %s30 = sadd.s32 1, %s21
      %s31 = scalar_select %p28, %s30, %s21
      %p32 = scmp.ge.s32.totalorder %s31, 2
      %s33 = scalar_select %p32, 0, %s31
      %s34 = ssub.s32 %s21, %s33
      %p35 = scmp.eq.s32.totalorder %s34, 0
      %s37 = sadd.s32 %s36, 1
      %s38 = scalar_select %p35, %s36, %s37
      %p41 = pneg %p35
      %p42 = scmp.eq.s32.totalorder %s14, 1
      %p43 = por %p41, %p42
      %p44 = scmp.ne.s32.totalorder %s36, %s39
      %p45 = scmp.eq.s32.totalorder %s14, 0
      %p46 = por %p44, %p45
      %p47 = scmp.ne.s32.totalorder %s36, %s39
      %p48 = scmp.eq.s32.totalorder %s19, 1
      %p49 = por %p47, %p48
      %p50 = scmp.ne.s32.totalorder %s39, %s40
      %p51 = scmp.eq.s32.totalorder %s19, 0
      %p52 = por %p50, %p51
      %p53 = scmp.ne.s32.totalorder %s39, %s40
      %p54 = scmp.eq.s32.totalorder %s20, 1
      %p55 = por %p53, %p54
      %p57 = scmp.ne.s32.totalorder %s40, %s56
      %p58 = scmp.eq.s32.totalorder %s20, 0
      %p59 = por %p57, %p58
      %s61 = sadd.s32 %s60, 1
      %p64 = scmp.eq.s32.totalorder %s14, 1
      %p65 = scmp.ne.s32.totalorder %s60, %s62
      %p66 = scmp.eq.s32.totalorder %s14, 0
      %p67 = por %p65, %p66
      %p68 = scmp.ne.s32.totalorder %s60, %s62
      %p69 = scmp.eq.s32.totalorder %s19, 1
      %p70 = por %p68, %p69
      %p71 = scmp.ne.s32.totalorder %s62, %s63
      %p72 = scmp.eq.s32.totalorder %s19, 0
      %p73 = por %p71, %p72
      %p74 = scmp.ne.s32.totalorder %s62, %s63
      %p75 = scmp.eq.s32.totalorder %s20, 1
      %p76 = por %p74, %p75
      %p78 = scmp.ne.s32.totalorder %s63, %s77
      %p79 = scmp.eq.s32.totalorder %s20, 0
      %p80 = por %p78, %p79
      %s81 = ssub.s32 %s22, %s29
      %p82 = scmp.eq.s32.totalorder %s81, 0
      %s84 = sadd.s32 %s83, 1
      %s85 = scalar_select %p82, %s83, %s84
      %p88 = pneg %p82
      %p89 = scmp.eq.s32.totalorder %s14, 1
      %p90 = por %p88, %p89
      %p91 = scmp.ne.s32.totalorder %s83, %s86
      %p92 = scmp.eq.s32.totalorder %s14, 0
      %p93 = por %p91, %p92
      %p94 = scmp.ne.s32.totalorder %s83, %s86
      %p95 = scmp.eq.s32.totalorder %s19, 1
      %p96 = por %p94, %p95
      %p97 = scmp.ne.s32.totalorder %s86, %s87
      %p98 = scmp.eq.s32.totalorder %s19, 0
      %p99 = por %p97, %p98
      %p100 = scmp.ne.s32.totalorder %s86, %s87
      %p101 = scmp.eq.s32.totalorder %s20, 1
      %p102 = por %p100, %p101
      %p104 = scmp.ne.s32.totalorder %s87, %s103
      %p105 = scmp.eq.s32.totalorder %s20, 0
      %p106 = por %p104, %p105
      %s108 = sadd.s32 %s107, 1
      %p111 = scmp.eq.s32.totalorder %s14, 1
      %p112 = scmp.ne.s32.totalorder %s107, %s109
      %p113 = scmp.eq.s32.totalorder %s14, 0
      %p114 = por %p112, %p113
      %p115 = scmp.ne.s32.totalorder %s107, %s109
      %p116 = scmp.eq.s32.totalorder %s19, 1
      %p117 = por %p115, %p116
      %p118 = scmp.ne.s32.totalorder %s109, %s110
      %p119 = scmp.eq.s32.totalorder %s19, 0
      %p120 = por %p118, %p119
      %p121 = scmp.ne.s32.totalorder %s109, %s110
      %p122 = scmp.eq.s32.totalorder %s20, 1
      %p123 = por %p121, %p122
      %p125 = scmp.ne.s32.totalorder %s110, %s124
      %p126 = scmp.eq.s32.totalorder %s20, 0
      %p127 = por %p125, %p126
      %s129 = sadd.s32 %s128, 1
      %p132 = scmp.eq.s32.totalorder %s14, 1
      %p133 = scmp.ne.s32.totalorder %s128, %s130
      %p134 = scmp.eq.s32.totalorder %s14, 0
      %p135 = por %p133, %p134
      %p136 = scmp.ne.s32.totalorder %s128, %s130
      %p137 = scmp.eq.s32.totalorder %s19, 1
      %p138 = por %p136, %p137
      %p139 = scmp.ne.s32.totalorder %s130, %s131
      %p140 = scmp.eq.s32.totalorder %s19, 0
      %p141 = por %p139, %p140
      %p142 = scmp.ne.s32.totalorder %s130, %s131
      %p143 = scmp.eq.s32.totalorder %s20, 1
      %p144 = por %p142, %p143
      %p146 = scmp.ne.s32.totalorder %s131, %s145
      %p147 = scmp.eq.s32.totalorder %s20, 0
      %p148 = por %p146, %p147
      %s149 = ssub.s32 %s21, %s33
      %s150 = ssub.s32 %s22, %s29
      %s151 = sor.u32 %s149, %s150
      %p152 = scmp.eq.s32.totalorder %s151, 0
      %s154 = sadd.s32 %s153, 1
      %s155 = scalar_select %p152, %s153, %s154
      %p158 = pneg %p152
      %p159 = scmp.eq.s32.totalorder %s14, 1
      %p160 = por %p158, %p159
      %p161 = scmp.ne.s32.totalorder %s153, %s156
      %p162 = scmp.eq.s32.totalorder %s14, 0
      %p163 = por %p161, %p162
      %p164 = scmp.ne.s32.totalorder %s153, %s156
      %p165 = scmp.eq.s32.totalorder %s19, 1
      %p166 = por %p164, %p165
      %p167 = scmp.ne.s32.totalorder %s156, %s157
      %p168 = scmp.eq.s32.totalorder %s19, 0
      %p169 = por %p167, %p168
      %p170 = scmp.ne.s32.totalorder %s156, %s157
      %p171 = scmp.eq.s32.totalorder %s20, 1
      %p172 = por %p170, %p171
      %p174 = scmp.ne.s32.totalorder %s157, %s173
      %p175 = scmp.eq.s32.totalorder %s20, 0
      %p176 = por %p174, %p175
      %p177 = scmp.le.s32.totalorder 1, %s14
      %p178 = scmp.lt.s32.totalorder %s14, 3
      %p179 = pnand %p177, %p178
      %p180 = pneg %p179
      // Predicated region
      $region9: #{pre_norm_residual.1} parent=5 // pred_check
        _
      $region10: #{pre_norm_residual.1} parent=5 // pred_check_branch
        %182 = sbr.rel (%p179) target = $region12
      $region11: #{pre_norm_residual.1} parent=5 // pred_region
        %s183 = ssub.s32 %s14, 1
        // Predicated region
        $region13: #{pre_norm_residual.1} parent=11 // pred_check
          %p184 = pneg %p73
        $region14: #{pre_norm_residual.1} parent=11 // pred_check_branch
          %186 = sbr.rel (%p184) target = $region16
        $region15: #{pre_norm_residual.1} parent=11 // pred_region
          _
        $region16: #{pre_norm_residual.1} parent=11 // pred_fallthru
          _
        // Predicated region
        $region17: #{pre_norm_residual.1} parent=11 // pred_check
          %p187 = pneg %p99
        $region18: #{pre_norm_residual.1} parent=11 // pred_check_branch
          %189 = sbr.rel (%p187) target = $region20
        $region19: #{pre_norm_residual.1} parent=11 // pred_region
          %p190 = scmp.lt.s32.totalorder %s24, 0
          %s191 = scalar_select %p190, %s24, 0
          %s192 = smul.addr %s191, 4
          %s193 = scalar_lea.vmem %s2, %s192
        $region20: #{pre_norm_residual.1} parent=11 // pred_fallthru
          _
        // Predicated region
        $region21: #{pre_norm_residual.1} parent=11 // pred_check
          %p194 = pneg %p120
        $region22: #{pre_norm_residual.1} parent=11 // pred_check_branch
          %196 = sbr.rel (%p194) target = $region24
        $region23: #{pre_norm_residual.1} parent=11 // pred_region
          _
        $region24: #{pre_norm_residual.1} parent=11 // pred_fallthru
          _
        // Predicated region
        $region25: #{pre_norm_residual.1} parent=11 // pred_check
          %p197 = pneg %p141
        $region26: #{pre_norm_residual.1} parent=11 // pred_check_branch
          %199 = sbr.rel (%p197) target = $region28
        $region27: #{pre_norm_residual.1} parent=11 // pred_region
          _
        $region28: #{pre_norm_residual.1} parent=11 // pred_fallthru
          _
      $region12: #{pre_norm_residual.1} parent=5 // pred_fallthru
        _
      %p200 = scmp.lt.s32.totalorder %s14, 2
      // Predicated region
      $region29: #{pre_norm_residual.1} parent=5 // pred_check
        %p201 = pneg %p200
      $region30: #{pre_norm_residual.1} parent=5 // pred_check_branch
        %203 = sbr.rel (%p201) target = $region32
      $region31: #{pre_norm_residual.1} parent=5 // pred_region
        // Predicated region
        $region33: #{pre_norm_residual.1} parent=31 // pred_check
          %p204 = pneg %p46
        $region34: #{pre_norm_residual.1} parent=31 // pred_check_branch
          %206 = sbr.rel (%p204) target = $region36
        $region35: #{pre_norm_residual.1} parent=31 // pred_region
          %p207 = scmp.lt.s32.totalorder %s21, 1
          %s208 = scalar_select %p207, %s21, 1
          %s209 = smul.addr %s208, 8
          %s210 = scalar_lea.vmem %s0, %s209
        $region36: #{pre_norm_residual.1} parent=31 // pred_fallthru
          _
      $region32: #{pre_norm_residual.1} parent=5 // pred_fallthru
        _
      %p211 = scmp.le.s32.totalorder 1, %s14
      %p212 = scmp.lt.s32.totalorder %s14, 3
      %p213 = pnand %p211, %p212
      %p214 = pneg %p213
      // Predicated region
      $region37: #{pre_norm_residual.1} parent=5 // pred_check
        _
      $region38: #{pre_norm_residual.1} parent=5 // pred_check_branch
        %216 = sbr.rel (%p213) target = $region40
      $region39: #{pre_norm_residual.1} parent=5 // pred_region
        %s217 = ssub.s32 %s14, 1
        %p218 = scmp.lt.s32.totalorder %s23, 1
        %s219 = scalar_select %p218, %s23, 1
        %s220 = smul.addr %s219, 8
        %s221 = scalar_lea.vmem %s0, %s220
        %p222 = pneg %p52
        %p223 = pneg %p49
        %p224 = pneg %p73
        %p225 = pneg %p70
        %p226 = scmp.lt.s32.totalorder %s24, 0
        %s227 = scalar_select %p226, %s24, 0
        %s228 = smul.addr %s227, 4
        %s229 = scalar_lea.vmem %s2, %s228
        %p230 = pneg %p99
        %p231 = pneg %p96
        %p232 = pneg %p120
        %p233 = pneg %p117
        %p234 = pneg %p141
        %p235 = pneg %p138
        %p236 = pneg %p169
        %p237 = pneg %p166
        %s238 = sand.u32 %s156, 1
        %s239 = scalar_lea.sflag [#allocation3], %s238
        %s240 = sand.u32 %s156, 1
        %s241 = smul.addr %s240, 8
        %s242 = scalar_lea.vmem [#allocation2], %s241
        %p243 = scmp.lt.s32.totalorder %s23, 1
        %s244 = scalar_select %p243, %s23, 1
        %s245 = smul.addr %s244, 8
        %s246 = scalar_lea.vmem %s0, %s245
        %p247 = scmp.lt.s32.totalorder %s24, 0
        %s248 = scalar_select %p247, %s24, 0
        %s249 = smul.addr %s248, 4
        %s250 = scalar_lea.vmem %s2, %s249
        %v252 = vld [vmem:[%s246] sm:$0xff]
        %vm253 = vcmask 261120
        %v254 = vsel %vm253, %v252, 0.0
        %255 = vadd.xlane.f32.xlu0 %v254
        %v256 = vpop.xlane.xlu0 %255
        %v257 = vmul.f32 %v256, 0.03125
        %v258 = vsub.f32 %v252, %v257
        %v259 = vmul.f32 %v258, %v258
        %v260 = vsel %vm253, %v259, 0.0
        %261 = vadd.xlane.f32.xlu0 %v260
        %v262 = vpop.xlane.xlu0 %261
        %v263 = vmul.f32 %v262, 0.03125
        %v264 = vadd.f32 %v263, 1e-05
        %v265 = vrsqrt.pop %v264
        %v266 = vmul.f32 %v258, %v265
        %v267 = vld [vmem:[%s4] sm:$0x1]
        %v269 = vlaneseq
        %v270 = vshrl.u32 %v269, 7
        %v271 = vsub.s32 0, %v270
        %v272 = vrot.slane %v267, %v271
        %v274 = vmul.f32 %v266, %v272
        %s275 = scalar_lea.vmem %s4, 1
        %v276 = vld [vmem:[%s275] sm:$0x1]
        %v278 = vlaneseq
        %v279 = vshrl.u32 %v278, 7
        %v280 = vsub.s32 0, %v279
        %v281 = vrot.slane %v276, %v280
        %v283 = vadd.f32 %v274, %v281
        %v284 = vpack.c.bf16 %v283, %v283
        %v285 = vld [vmem:[%s1] sm:$0xf]
        %v286 = vld [vmem:[%s1 + $0x4] sm:$0xf]
        %v287 = vld [vmem:[%s1 + $0x8] sm:$0xf]
        %v288 = vld [vmem:[%s1 + $0xc] sm:$0xf]
        %v289 = vld [vmem:[%s1 + $0x10] sm:$0xf]
        %v290 = vld [vmem:[%s1 + $0x14] sm:$0xf]
        %v291 = vld [vmem:[%s1 + $0x18] sm:$0xf]
        %v292 = vld [vmem:[%s1 + $0x1c] sm:$0xf]
        %v293 = vld [vmem:[%s1 + $0x20] sm:$0xf]
        %v294 = vld [vmem:[%s1 + $0x24] sm:$0xf]
        %v295 = vld [vmem:[%s1 + $0x28] sm:$0xf]
        %v296 = vld [vmem:[%s1 + $0x2c] sm:$0xf]
        %v297 = vld [vmem:[%s1 + $0x30] sm:$0xf]
        %v298 = vld [vmem:[%s1 + $0x34] sm:$0xf]
        %v299 = vld [vmem:[%s1 + $0x38] sm:$0xf]
        %v300 = vld [vmem:[%s1 + $0x3c] sm:$0xf]
        %v317 = vunpack.c.l.b16 %v285
        %v318 = vunpack.c.l.b16 %v286
        %v319 = vunpack.c.l.b16 %v287
        %v320 = vunpack.c.l.b16 %v288
        %v321 = vunpack.c.l.b16 %v289
        %v322 = vunpack.c.l.b16 %v290
        %v323 = vunpack.c.l.b16 %v291
        %v324 = vunpack.c.l.b16 %v292
        %v325 = vunpack.c.l.b16 %v293
        %v326 = vunpack.c.l.b16 %v294
        %v327 = vunpack.c.l.b16 %v295
        %v328 = vunpack.c.l.b16 %v296
        %v329 = vunpack.c.l.b16 %v297
        %v330 = vunpack.c.l.b16 %v298
        %v331 = vunpack.c.l.b16 %v299
        %v332 = vunpack.c.l.b16 %v300
        %v333 = vpack.c.b16 %v318, %v317
        %v334 = vpack.c.b16 %v320, %v319
        %v335 = vpack.c.b16 %v322, %v321
        %v336 = vpack.c.b16 %v324, %v323
        %v337 = vpack.c.b16 %v326, %v325
        %v338 = vpack.c.b16 %v328, %v327
        %v339 = vpack.c.b16 %v330, %v329
        %v340 = vpack.c.b16 %v332, %v331
        %vm341 = vcmask 64512
        %v343 = vsel %vm341, %v333, 0
        %v346 = vsel %vm341, %v334, 0
        %v349 = vsel %vm341, %v335, 0
        %v352 = vsel %vm341, %v336, 0
        %v355 = vsel %vm341, %v337, 0
        %v358 = vsel %vm341, %v338, 0
        %v361 = vsel %vm341, %v339, 0
        %v364 = vsel %vm341, %v340, 0
        %vm366 = vcmask 1043456
        %v368 = vsel %vm366, %v284, 0
        %370 = vmatprep.subr.bf16.mxu0 0
        %371 = vmatpush1.bf16.msra.mxu0 0
        %372 = vmatprep.subr.bf16.mxu0 0
        %373 = vmatpush1.bf16.msra.mxu0 0
        %374 = vmatprep.subr.bf16.mxu0 0
        %375 = vmatpush1.bf16.msra.mxu0 0
        %376 = vmatprep.subr.bf16.mxu0 0
        %377 = vmatpush1.bf16.msra.mxu0 0
        %378 = vmatprep.subr.bf16.mxu0 0
        %379 = vmatpush1.bf16.msra.mxu0 0
        %380 = vmatprep.subr.bf16.mxu0 0
        %381 = vmatpush1.bf16.msra.mxu0 0
        %382 = vmatprep.subr.bf16.mxu0 0
        %383 = vmatpush1.bf16.msra.mxu0 0
        %384 = vmatprep.subr.bf16.mxu0 0
        %385 = vmatpush1.bf16.msra.mxu0 %v368
        %386 = vmatprep.subr.bf16.mxu0 0
        %387 = vmatpush2.bf16.msra.mxu0 0
        %388 = vmatprep.subr.bf16.mxu0 0
        %389 = vmatpush2.bf16.msra.mxu0 0
        %390 = vmatprep.subr.bf16.mxu0 0
        %391 = vmatpush2.bf16.msra.mxu0 0
        %392 = vmatprep.subr.bf16.mxu0 0
        %393 = vmatpush2.bf16.msra.mxu0 0
        %394 = vmatprep.subr.bf16.mxu0 0
        %395 = vmatpush2.bf16.msra.mxu0 0
        %396 = vmatprep.subr.bf16.mxu0 0
        %397 = vmatpush2.bf16.msra.mxu0 0
        %398 = vmatprep.subr.bf16.mxu0 0
        %399 = vmatpush2.bf16.msra.mxu0 0
        %400 = vmatprep.subr.bf16.mxu0 0
        %401 = vmatpush2.bf16.msra.mxu0 0
        %402 = vmatprep.mubr.bf16.mxu0 0
        %403 = vmatmul.mubr.bf16.gmra.mxu0 %v343
        %v404 = vpop.f32.mrf.mxu0
        %v405 = vadd.f32 0.0, %v404
        %v406 = vpop.f32.mrf.mxu0
        %v407 = vpop.f32.mrf.mxu0
        %v408 = vadd.f32 0.0, %v407
        %v409 = vpop.f32.mrf.mxu0
        %410 = vmatprep.mubr.bf16.mxu0 0
        %411 = vmatmul.mubr.bf16.gmra.mxu0 %v346
        %v412 = vpop.f32.mrf.mxu0
        %v413 = vadd.f32 0.0, %v412
        %v414 = vpop.f32.mrf.mxu0
        %v415 = vpop.f32.mrf.mxu0
        %v416 = vadd.f32 0.0, %v415
        %v417 = vpop.f32.mrf.mxu0
        %418 = vmatprep.mubr.bf16.mxu0 0
        %419 = vmatmul.mubr.bf16.gmra.mxu0 %v349
        %v420 = vpop.f32.mrf.mxu0
        %v421 = vadd.f32 0.0, %v420
        %v422 = vpop.f32.mrf.mxu0
        %v423 = vpop.f32.mrf.mxu0
        %v424 = vadd.f32 0.0, %v423
        %v425 = vpop.f32.mrf.mxu0
        %426 = vmatprep.mubr.bf16.mxu0 0
        %427 = vmatmul.mubr.bf16.gmra.mxu0 %v352
        %v428 = vpop.f32.mrf.mxu0
        %v429 = vadd.f32 0.0, %v428
        %v430 = vpop.f32.mrf.mxu0
        %v431 = vpop.f32.mrf.mxu0
        %v432 = vadd.f32 0.0, %v431
        %v433 = vpop.f32.mrf.mxu0
        %434 = vmatprep.mubr.bf16.mxu0 0
        %435 = vmatmul.mubr.bf16.gmra.mxu0 %v355
        %v436 = vpop.f32.mrf.mxu0
        %v437 = vadd.f32 0.0, %v436
        %v438 = vpop.f32.mrf.mxu0
        %v439 = vpop.f32.mrf.mxu0
        %v440 = vadd.f32 0.0, %v439
        %v441 = vpop.f32.mrf.mxu0
        %442 = vmatprep.mubr.bf16.mxu0 0
        %443 = vmatmul.mubr.bf16.gmra.mxu0 %v358
        %v444 = vpop.f32.mrf.mxu0
        %v445 = vadd.f32 0.0, %v444
        %v446 = vpop.f32.mrf.mxu0
        %v447 = vpop.f32.mrf.mxu0
        %v448 = vadd.f32 0.0, %v447
        %v449 = vpop.f32.mrf.mxu0
        %450 = vmatprep.mubr.bf16.mxu0 0
        %451 = vmatmul.mubr.bf16.gmra.mxu0 %v361
        %v452 = vpop.f32.mrf.mxu0
        %v453 = vadd.f32 0.0, %v452
        %v454 = vpop.f32.mrf.mxu0
        %v455 = vpop.f32.mrf.mxu0
        %v456 = vadd.f32 0.0, %v455
        %v457 = vpop.f32.mrf.mxu0
        %458 = vmatprep.mubr.bf16.mxu0 0
        %459 = vmatmul.mubr.bf16.gmra.mxu0 %v364
        %v460 = vpop.f32.mrf.mxu0
        %v461 = vadd.f32 0.0, %v460
        %v462 = vpop.f32.mrf.mxu0
        %v463 = vpop.f32.mrf.mxu0
        %v464 = vadd.f32 0.0, %v463
        %v465 = vpop.f32.mrf.mxu0
        %466 = vdwg.mxu0
        %s467 = scalar_lea.vmem %s1, 64
        %v468 = vld [vmem:[%s467] sm:$0xf]
        %v469 = vld [vmem:[%s467 + $0x4] sm:$0xf]
        %v470 = vld [vmem:[%s467 + $0x8] sm:$0xf]
        %v471 = vld [vmem:[%s467 + $0xc] sm:$0xf]
        %v472 = vld [vmem:[%s467 + $0x10] sm:$0xf]
        %v473 = vld [vmem:[%s467 + $0x14] sm:$0xf]
        %v474 = vld [vmem:[%s467 + $0x18] sm:$0xf]
        %v475 = vld [vmem:[%s467 + $0x1c] sm:$0xf]
        %v476 = vld [vmem:[%s467 + $0x20] sm:$0xf]
        %v477 = vld [vmem:[%s467 + $0x24] sm:$0xf]
        %v478 = vld [vmem:[%s467 + $0x28] sm:$0xf]
        %v479 = vld [vmem:[%s467 + $0x2c] sm:$0xf]
        %v480 = vld [vmem:[%s467 + $0x30] sm:$0xf]
        %v481 = vld [vmem:[%s467 + $0x34] sm:$0xf]
        %v482 = vld [vmem:[%s467 + $0x38] sm:$0xf]
        %v483 = vld [vmem:[%s467 + $0x3c] sm:$0xf]
        %v500 = vunpack.c.l.b16 %v468
        %v501 = vunpack.c.l.b16 %v469
        %v502 = vunpack.c.l.b16 %v470
        %v503 = vunpack.c.l.b16 %v471
        %v504 = vunpack.c.l.b16 %v472
        %v505 = vunpack.c.l.b16 %v473
        %v506 = vunpack.c.l.b16 %v474
        %v507 = vunpack.c.l.b16 %v475
        %v508 = vunpack.c.l.b16 %v476
        %v509 = vunpack.c.l.b16 %v477
        %v510 = vunpack.c.l.b16 %v478
        %v511 = vunpack.c.l.b16 %v479
        %v512 = vunpack.c.l.b16 %v480
        %v513 = vunpack.c.l.b16 %v481
        %v514 = vunpack.c.l.b16 %v482
        %v515 = vunpack.c.l.b16 %v483
        %v516 = vpack.c.b16 %v501, %v500
        %v517 = vpack.c.b16 %v503, %v502
        %v518 = vpack.c.b16 %v505, %v504
        %v519 = vpack.c.b16 %v507, %v506
        %v520 = vpack.c.b16 %v509, %v508
        %v521 = vpack.c.b16 %v511, %v510
        %v522 = vpack.c.b16 %v513, %v512
        %v523 = vpack.c.b16 %v515, %v514
        %v525 = vsel %vm341, %v516, 0
        %v528 = vsel %vm341, %v517, 0
        %v531 = vsel %vm341, %v518, 0
        %v534 = vsel %vm341, %v519, 0
        %v537 = vsel %vm341, %v520, 0
        %v540 = vsel %vm341, %v521, 0
        %v543 = vsel %vm341, %v522, 0
        %v546 = vsel %vm341, %v523, 0
        %548 = vmatprep.subr.bf16.mxu0 0
        %549 = vmatpush1.bf16.msra.mxu0 0
        %550 = vmatprep.subr.bf16.mxu0 0
        %551 = vmatpush1.bf16.msra.mxu0 0
        %552 = vmatprep.subr.bf16.mxu0 0
        %553 = vmatpush1.bf16.msra.mxu0 0
        %554 = vmatprep.subr.bf16.mxu0 0
        %555 = vmatpush1.bf16.msra.mxu0 0
        %556 = vmatprep.subr.bf16.mxu0 0
        %557 = vmatpush1.bf16.msra.mxu0 0
        %558 = vmatprep.subr.bf16.mxu0 0
        %559 = vmatpush1.bf16.msra.mxu0 0
        %560 = vmatprep.subr.bf16.mxu0 0
        %561 = vmatpush1.bf16.msra.mxu0 0
        %562 = vmatprep.subr.bf16.mxu0 0
        %563 = vmatpush1.bf16.msra.mxu0 %v368
        %564 = vmatprep.subr.bf16.mxu0 0
        %565 = vmatpush2.bf16.msra.mxu0 0
        %566 = vmatprep.subr.bf16.mxu0 0
        %567 = vmatpush2.bf16.msra.mxu0 0
        %568 = vmatprep.subr.bf16.mxu0 0
        %569 = vmatpush2.bf16.msra.mxu0 0
        %570 = vmatprep.subr.bf16.mxu0 0
        %571 = vmatpush2.bf16.msra.mxu0 0
        %572 = vmatprep.subr.bf16.mxu0 0
        %573 = vmatpush2.bf16.msra.mxu0 0
        %574 = vmatprep.subr.bf16.mxu0 0
        %575 = vmatpush2.bf16.msra.mxu0 0
        %576 = vmatprep.subr.bf16.mxu0 0
        %577 = vmatpush2.bf16.msra.mxu0 0
        %578 = vmatprep.subr.bf16.mxu0 0
        %579 = vmatpush2.bf16.msra.mxu0 0
        %580 = vmatprep.mubr.bf16.mxu0 0
        %581 = vmatmul.mubr.bf16.gmra.mxu0 %v525
        %v582 = vpop.f32.mrf.mxu0
        %v583 = vadd.f32 0.0, %v582
        %v584 = vpop.f32.mrf.mxu0
        %v585 = vpop.f32.mrf.mxu0
        %v586 = vadd.f32 0.0, %v585
        %v587 = vpop.f32.mrf.mxu0
        %588 = vmatprep.mubr.bf16.mxu0 0
        %589 = vmatmul.mubr.bf16.gmra.mxu0 %v528
        %v590 = vpop.f32.mrf.mxu0
        %v591 = vadd.f32 0.0, %v590
        %v592 = vpop.f32.mrf.mxu0
        %v593 = vpop.f32.mrf.mxu0
        %v594 = vadd.f32 0.0, %v593
        %v595 = vpop.f32.mrf.mxu0
        %596 = vmatprep.mubr.bf16.mxu0 0
        %597 = vmatmul.mubr.bf16.gmra.mxu0 %v531
        %v598 = vpop.f32.mrf.mxu0
        %v599 = vadd.f32 0.0, %v598
        %v600 = vpop.f32.mrf.mxu0
        %v601 = vpop.f32.mrf.mxu0
        %v602 = vadd.f32 0.0, %v601
        %v603 = vpop.f32.mrf.mxu0
        %604 = vmatprep.mubr.bf16.mxu0 0
        %605 = vmatmul.mubr.bf16.gmra.mxu0 %v534
        %v606 = vpop.f32.mrf.mxu0
        %v607 = vadd.f32 0.0, %v606
        %v608 = vpop.f32.mrf.mxu0
        %v609 = vpop.f32.mrf.mxu0
        %v610 = vadd.f32 0.0, %v609
        %v611 = vpop.f32.mrf.mxu0
        %612 = vmatprep.mubr.bf16.mxu0 0
        %613 = vmatmul.mubr.bf16.gmra.mxu0 %v537
        %v614 = vpop.f32.mrf.mxu0
        %v615 = vadd.f32 0.0, %v614
        %v616 = vpop.f32.mrf.mxu0
        %v617 = vpop.f32.mrf.mxu0
        %v618 = vadd.f32 0.0, %v617
        %v619 = vpop.f32.mrf.mxu0
        %620 = vmatprep.mubr.bf16.mxu0 0
        %621 = vmatmul.mubr.bf16.gmra.mxu0 %v540
        %v622 = vpop.f32.mrf.mxu0
        %v623 = vadd.f32 0.0, %v622
        %v624 = vpop.f32.mrf.mxu0
        %v625 = vpop.f32.mrf.mxu0
        %v626 = vadd.f32 0.0, %v625
        %v627 = vpop.f32.mrf.mxu0
        %628 = vmatprep.mubr.bf16.mxu0 0
        %629 = vmatmul.mubr.bf16.gmra.mxu0 %v543
        %v630 = vpop.f32.mrf.mxu0
        %v631 = vadd.f32 0.0, %v630
        %v632 = vpop.f32.mrf.mxu0
        %v633 = vpop.f32.mrf.mxu0
        %v634 = vadd.f32 0.0, %v633
        %v635 = vpop.f32.mrf.mxu0
        %636 = vmatprep.mubr.bf16.mxu0 0
        %637 = vmatmul.mubr.bf16.gmra.mxu0 %v546
        %v638 = vpop.f32.mrf.mxu0
        %v639 = vadd.f32 0.0, %v638
        %v640 = vpop.f32.mrf.mxu0
        %v641 = vpop.f32.mrf.mxu0
        %v642 = vadd.f32 0.0, %v641
        %v643 = vpop.f32.mrf.mxu0
        %644 = vdwg.mxu0
        %v645 = vld [vmem:[%s3] sm:$0xf]
        %v646 = vld [vmem:[%s3 + $0x4] sm:$0xf]
        %v647 = vld [vmem:[%s3 + $0x8] sm:$0xf]
        %v648 = vld [vmem:[%s3 + $0xc] sm:$0xf]
        %v649 = vld [vmem:[%s3 + $0x10] sm:$0xf]
        %v650 = vld [vmem:[%s3 + $0x14] sm:$0xf]
        %v651 = vld [vmem:[%s3 + $0x18] sm:$0xf]
        %v652 = vld [vmem:[%s3 + $0x1c] sm:$0xf]
        %v653 = vld [vmem:[%s3 + $0x20] sm:$0xf]
        %v654 = vld [vmem:[%s3 + $0x24] sm:$0xf]
        %v655 = vld [vmem:[%s3 + $0x28] sm:$0xf]
        %v656 = vld [vmem:[%s3 + $0x2c] sm:$0xf]
        %v657 = vld [vmem:[%s3 + $0x30] sm:$0xf]
        %v658 = vld [vmem:[%s3 + $0x34] sm:$0xf]
        %v659 = vld [vmem:[%s3 + $0x38] sm:$0xf]
        %v660 = vld [vmem:[%s3 + $0x3c] sm:$0xf]
        %v661 = vunpack.c.l.bf16 %v645
        %v662 = vunpack.c.l.bf16 %v646
        %v663 = vunpack.c.l.bf16 %v647
        %v664 = vunpack.c.l.bf16 %v648
        %v665 = vunpack.c.l.bf16 %v649
        %v666 = vunpack.c.l.bf16 %v650
        %v667 = vunpack.c.l.bf16 %v651
        %v668 = vunpack.c.l.bf16 %v652
        %v669 = vunpack.c.l.bf16 %v653
        %v670 = vunpack.c.l.bf16 %v654
        %v671 = vunpack.c.l.bf16 %v655
        %v672 = vunpack.c.l.bf16 %v656
        %v673 = vunpack.c.l.bf16 %v657
        %v674 = vunpack.c.l.bf16 %v658
        %v675 = vunpack.c.l.bf16 %v659
        %v676 = vunpack.c.l.bf16 %v660
        %s677 = scalar_lea.vmem %s3, 64
        %v678 = vld [vmem:[%s677] sm:$0xf]
        %v679 = vld [vmem:[%s677 + $0x4] sm:$0xf]
        %v680 = vld [vmem:[%s677 + $0x8] sm:$0xf]
        %v681 = vld [vmem:[%s677 + $0xc] sm:$0xf]
        %v682 = vld [vmem:[%s677 + $0x10] sm:$0xf]
        %v683 = vld [vmem:[%s677 + $0x14] sm:$0xf]
        %v684 = vld [vmem:[%s677 + $0x18] sm:$0xf]
        %v685 = vld [vmem:[%s677 + $0x1c] sm:$0xf]
        %v686 = vld [vmem:[%s677 + $0x20] sm:$0xf]
        %v687 = vld [vmem:[%s677 + $0x24] sm:$0xf]
        %v688 = vld [vmem:[%s677 + $0x28] sm:$0xf]
        %v689 = vld [vmem:[%s677 + $0x2c] sm:$0xf]
        %v690 = vld [vmem:[%s677 + $0x30] sm:$0xf]
        %v691 = vld [vmem:[%s677 + $0x34] sm:$0xf]
        %v692 = vld [vmem:[%s677 + $0x38] sm:$0xf]
        %v693 = vld [vmem:[%s677 + $0x3c] sm:$0xf]
        %v694 = vunpack.c.l.bf16 %v678
        %v695 = vunpack.c.l.bf16 %v679
        %v696 = vunpack.c.l.bf16 %v680
        %v697 = vunpack.c.l.bf16 %v681
        %v698 = vunpack.c.l.bf16 %v682
        %v699 = vunpack.c.l.bf16 %v683
        %v700 = vunpack.c.l.bf16 %v684
        %v701 = vunpack.c.l.bf16 %v685
        %v702 = vunpack.c.l.bf16 %v686
        %v703 = vunpack.c.l.bf16 %v687
        %v704 = vunpack.c.l.bf16 %v688
        %v705 = vunpack.c.l.bf16 %v689
        %v706 = vunpack.c.l.bf16 %v690
        %v707 = vunpack.c.l.bf16 %v691
        %v708 = vunpack.c.l.bf16 %v692
        %v709 = vunpack.c.l.bf16 %v693
        %v710 = vmul.f32 %v405, %v661
        %v711 = vmul.f32 %v408, %v662
        %v712 = vmul.f32 %v413, %v663
        %v713 = vmul.f32 %v416, %v664
        %v714 = vmul.f32 %v421, %v665
        %v715 = vmul.f32 %v424, %v666
        %v716 = vmul.f32 %v429, %v667
        %v717 = vmul.f32 %v432, %v668
        %v718 = vmul.f32 %v437, %v669
        %v719 = vmul.f32 %v440, %v670
        %v720 = vmul.f32 %v445, %v671
        %v721 = vmul.f32 %v448, %v672
        %v722 = vmul.f32 %v453, %v673
        %v723 = vmul.f32 %v456, %v674
        %v724 = vmul.f32 %v461, %v675
        %v725 = vmul.f32 %v464, %v676
        %v726 = vmul.f32 %v583, %v694
        %v727 = vmul.f32 %v586, %v695
        %v728 = vmul.f32 %v591, %v696
        %v729 = vmul.f32 %v594, %v697
        %v730 = vmul.f32 %v599, %v698
        %v731 = vmul.f32 %v602, %v699
        %v732 = vmul.f32 %v607, %v700
        %v733 = vmul.f32 %v610, %v701
        %v734 = vmul.f32 %v615, %v702
        %v735 = vmul.f32 %v618, %v703
        %v736 = vmul.f32 %v623, %v704
        %v737 = vmul.f32 %v626, %v705
        %v738 = vmul.f32 %v631, %v706
        %v739 = vmul.f32 %v634, %v707
        %v740 = vmul.f32 %v639, %v708
        %v741 = vmul.f32 %v642, %v709
        %v742 = vsub.f32 %v710, %v726
        %v743 = vsub.f32 %v711, %v727
        %v744 = vsub.f32 %v712, %v728
        %v745 = vsub.f32 %v713, %v729
        %v746 = vsub.f32 %v714, %v730
        %v747 = vsub.f32 %v715, %v731
        %v748 = vsub.f32 %v716, %v732
        %v749 = vsub.f32 %v717, %v733
        %v750 = vsub.f32 %v718, %v734
        %v751 = vsub.f32 %v719, %v735
        %v752 = vsub.f32 %v720, %v736
        %v753 = vsub.f32 %v721, %v737
        %v754 = vsub.f32 %v722, %v738
        %v755 = vsub.f32 %v723, %v739
        %v756 = vsub.f32 %v724, %v740
        %v757 = vsub.f32 %v725, %v741
        %v758 = vpack.c.bf16 %v743, %v742
        %v759 = vpack.c.bf16 %v745, %v744
        %v760 = vpack.c.bf16 %v747, %v746
        %v761 = vpack.c.bf16 %v749, %v748
        %v762 = vpack.c.bf16 %v751, %v750
        %v763 = vpack.c.bf16 %v753, %v752
        %v764 = vpack.c.bf16 %v755, %v754
        %v765 = vpack.c.bf16 %v757, %v756
        %v766 = vmul.f32 %v405, %v694
        %v767 = vmul.f32 %v408, %v695
        %v768 = vmul.f32 %v413, %v696
        %v769 = vmul.f32 %v416, %v697
        %v770 = vmul.f32 %v421, %v698
        %v771 = vmul.f32 %v424, %v699
        %v772 = vmul.f32 %v429, %v700
        %v773 = vmul.f32 %v432, %v701
        %v774 = vmul.f32 %v437, %v702
        %v775 = vmul.f32 %v440, %v703
        %v776 = vmul.f32 %v445, %v704
        %v777 = vmul.f32 %v448, %v705
        %v778 = vmul.f32 %v453, %v706
        %v779 = vmul.f32 %v456, %v707
        %v780 = vmul.f32 %v461, %v708
        %v781 = vmul.f32 %v464, %v709
        %v782 = vmul.f32 %v583, %v661
        %v783 = vmul.f32 %v586, %v662
        %v784 = vmul.f32 %v591, %v663
        %v785 = vmul.f32 %v594, %v664
        %v786 = vmul.f32 %v599, %v665
        %v787 = vmul.f32 %v602, %v666
        %v788 = vmul.f32 %v607, %v667
        %v789 = vmul.f32 %v610, %v668
        %v790 = vmul.f32 %v615, %v669
        %v791 = vmul.f32 %v618, %v670
        %v792 = vmul.f32 %v623, %v671
        %v793 = vmul.f32 %v626, %v672
        %v794 = vmul.f32 %v631, %v673
        %v795 = vmul.f32 %v634, %v674
        %v796 = vmul.f32 %v639, %v675
        %v797 = vmul.f32 %v642, %v676
        %v798 = vadd.f32 %v766, %v782
        %v799 = vadd.f32 %v767, %v783
        %v800 = vadd.f32 %v768, %v784
        %v801 = vadd.f32 %v769, %v785
        %v802 = vadd.f32 %v770, %v786
        %v803 = vadd.f32 %v771, %v787
        %v804 = vadd.f32 %v772, %v788
        %v805 = vadd.f32 %v773, %v789
        %v806 = vadd.f32 %v774, %v790
        %v807 = vadd.f32 %v775, %v791
        %v808 = vadd.f32 %v776, %v792
        %v809 = vadd.f32 %v777, %v793
        %v810 = vadd.f32 %v778, %v794
        %v811 = vadd.f32 %v779, %v795
        %v812 = vadd.f32 %v780, %v796
        %v813 = vadd.f32 %v781, %v797
        %v814 = vpack.c.bf16 %v799, %v798
        %v815 = vpack.c.bf16 %v801, %v800
        %v816 = vpack.c.bf16 %v803, %v802
        %v817 = vpack.c.bf16 %v805, %v804
        %v818 = vpack.c.bf16 %v807, %v806
        %v819 = vpack.c.bf16 %v809, %v808
        %v820 = vpack.c.bf16 %v811, %v810
        %v821 = vpack.c.bf16 %v813, %v812
        %v822 = vld [vmem:[%s250] sm:$0xf]
        %s823 = scalar_lea.vmem %s250, 4
        %v824 = vld [vmem:[%s823] sm:$0xf]
        %825 = vmatprep.subr.bf16.mxu0 0
        %826 = vmatpush1.bf16.msra.mxu0 %v821
        %827 = vmatprep.subr.bf16.mxu0 0
        %828 = vmatpush1.bf16.msra.mxu0 %v820
        %829 = vmatprep.subr.bf16.mxu0 0
        %830 = vmatpush1.bf16.msra.mxu0 %v819
        %831 = vmatprep.subr.bf16.mxu0 0
        %832 = vmatpush1.bf16.msra.mxu0 %v818
        %833 = vmatprep.subr.bf16.mxu0 0
        %834 = vmatpush1.bf16.msra.mxu0 %v817
        %835 = vmatprep.subr.bf16.mxu0 0
        %836 = vmatpush1.bf16.msra.mxu0 %v816
        %837 = vmatprep.subr.bf16.mxu0 0
        %838 = vmatpush1.bf16.msra.mxu0 %v815
        %839 = vmatprep.subr.bf16.mxu0 0
        %840 = vmatpush1.bf16.msra.mxu0 %v814
        %841 = vmatprep.subr.bf16.mxu0 0
        %842 = vmatpush2.bf16.msra.mxu0 0
        %843 = vmatprep.subr.bf16.mxu0 0
        %844 = vmatpush2.bf16.msra.mxu0 0
        %845 = vmatprep.subr.bf16.mxu0 0
        %846 = vmatpush2.bf16.msra.mxu0 0
        %847 = vmatprep.subr.bf16.mxu0 0
        %848 = vmatpush2.bf16.msra.mxu0 0
        %849 = vmatprep.subr.bf16.mxu0 0
        %850 = vmatpush2.bf16.msra.mxu0 0
        %851 = vmatprep.subr.bf16.mxu0 0
        %852 = vmatpush2.bf16.msra.mxu0 0
        %853 = vmatprep.subr.bf16.mxu0 0
        %854 = vmatpush2.bf16.msra.mxu0 0
        %855 = vmatprep.subr.bf16.mxu0 0
        %856 = vmatpush2.bf16.msra.mxu0 0
        %857 = vmatprep.mubr.bf16.mxu0 0
        %858 = vmatmul.mubr.bf16.gmra.mxu0 %v824
        %v859 = vpop.f32.mrf.mxu0
        %v860 = vadd.f32 0.0, %v859
        %v861 = vpop.f32.mrf.mxu0
        %v862 = vpop.f32.mrf.mxu0
        %v863 = vpop.f32.mrf.mxu0
        %864 = vdwg.mxu0
        %865 = vmatprep.subr.bf16.mxu0 0
        %866 = vmatpush1.bf16.msra.mxu0 %v765
        %867 = vmatprep.subr.bf16.mxu0 0
        %868 = vmatpush1.bf16.msra.mxu0 %v764
        %869 = vmatprep.subr.bf16.mxu0 0
        %870 = vmatpush1.bf16.msra.mxu0 %v763
        %871 = vmatprep.subr.bf16.mxu0 0
        %872 = vmatpush1.bf16.msra.mxu0 %v762
        %873 = vmatprep.subr.bf16.mxu0 0
        %874 = vmatpush1.bf16.msra.mxu0 %v761
        %875 = vmatprep.subr.bf16.mxu0 0
        %876 = vmatpush1.bf16.msra.mxu0 %v760
        %877 = vmatprep.subr.bf16.mxu0 0
        %878 = vmatpush1.bf16.msra.mxu0 %v759
        %879 = vmatprep.subr.bf16.mxu0 0
        %880 = vmatpush1.bf16.msra.mxu0 %v758
        %881 = vmatprep.subr.bf16.mxu0 0
        %882 = vmatpush2.bf16.msra.mxu0 0
        %883 = vmatprep.subr.bf16.mxu0 0
        %884 = vmatpush2.bf16.msra.mxu0 0
        %885 = vmatprep.subr.bf16.mxu0 0
        %886 = vmatpush2.bf16.msra.mxu0 0
        %887 = vmatprep.subr.bf16.mxu0 0
        %888 = vmatpush2.bf16.msra.mxu0 0
        %889 = vmatprep.subr.bf16.mxu0 0
        %890 = vmatpush2.bf16.msra.mxu0 0
        %891 = vmatprep.subr.bf16.mxu0 0
        %892 = vmatpush2.bf16.msra.mxu0 0
        %893 = vmatprep.subr.bf16.mxu0 0
        %894 = vmatpush2.bf16.msra.mxu0 0
        %895 = vmatprep.subr.bf16.mxu0 0
        %896 = vmatpush2.bf16.msra.mxu0 0
        %897 = vmatprep.mubr.bf16.mxu0 0
        %898 = vmatmul.mubr.bf16.gmra.mxu0 %v822
        %v899 = vpop.f32.mrf.mxu0
        %v900 = vadd.f32 %v860, %v899
        %v901 = vpop.f32.mrf.mxu0
        %v902 = vpop.f32.mrf.mxu0
        %v903 = vpop.f32.mrf.mxu0
        %904 = vdwg.mxu0
        %v905 = vadd.f32 %v900, %v252
        %906 = vst.msk [vmem:[%s242] sm:$0xff] %vm253, %v905
        %s907 = sand.u32 %s156, 1
        %s908 = scalar_lea.sflag [#allocation3], %s907
        %s909 = sand.u32 %s156, 1
        %s910 = smul.addr %s909, 8
        %s911 = scalar_lea.vmem [#allocation2], %s910
        // Predicated region
        $region41: #{pre_norm_residual.1} parent=39 // pred_check
          %p912 = pneg %p166
        $region42: #{pre_norm_residual.1} parent=39 // pred_check_branch
          %914 = sbr.rel (%p912) target = $region44
        $region43: #{pre_norm_residual.1} parent=39 // pred_region
          %s916 = ssub.s32 128, 128
          %917 = vsyncadd %s908, %s916
          %s918 = sadd.s32 %s24, %s23
          %s919 = smul.addr %s918, 128
          %s920 = scalar_lea.hbm %s5, %s919
          %s922 = sshll.u32 %s911, 4
          %s923 = int_to_ptr.vmem [resolvable:$true] %s922
          %925 = dma.vmem_to_hbm [thread:$0]  %s923, 128, %s920, %s908
        $region44: #{pre_norm_residual.1} parent=39 // pred_fallthru
          _
      $region40: #{pre_norm_residual.1} parent=5 // pred_fallthru
        _
      %p926 = scmp.le.s32.totalorder 2, %s14
      // Predicated region
      $region45: #{pre_norm_residual.1} parent=5 // pred_check
        %p927 = pneg %p926
      $region46: #{pre_norm_residual.1} parent=5 // pred_check_branch
        %929 = sbr.rel (%p927) target = $region48
      $region47: #{pre_norm_residual.1} parent=5 // pred_region
        %s930 = ssub.s32 %s14, 2
        // Predicated region
        $region49: #{pre_norm_residual.1} parent=47 // pred_check
          %p931 = pneg %p172
        $region50: #{pre_norm_residual.1} parent=47 // pred_check_branch
          %933 = sbr.rel (%p931) target = $region52
        $region51: #{pre_norm_residual.1} parent=47 // pred_region
          %s934 = sand.u32 %s157, 1
          %s935 = scalar_lea.sflag [#allocation3], %s934
          %s936 = sand.u32 %s157, 1
          %s937 = smul.addr %s936, 8
          %s938 = scalar_lea.vmem [#allocation2], %s937
          %939 = dma.done %s935, 128
        $region52: #{pre_norm_residual.1} parent=47 // pred_fallthru
          _
      $region48: #{pre_norm_residual.1} parent=5 // pred_fallthru
        _
    $region6: #{pre_norm_residual.1} parent=1 // loop_footer
      %s18 = sadd.s32 1, %s14
    $region7: #{pre_norm_residual.1} parent=1 // loop_footer_branch
      %13 = sbr.rel target = $region3
    $region8: #{pre_norm_residual.1} parent=1 // loop_exit
      _
    %940 = vsyncpa [#allocation3], 1
    %s941 = scalar_lea.sflag [#allocation3], 1
    %942 = vsyncpa %s941, 1

</llo_original>
